<compile_context>
chip_gen: v5e
topology: v5e:2x2
jax: 0.10.0
libtpu: 0.0.40
codegen_flags: <defaults>
</compile_context>

<pallas_src>
import jax
import jax.numpy as jnp
from jax.experimental import pallas as pl
from jax.experimental.pallas import tpu as pltpu


def _round_up(x, m):
    return ((x + m - 1) // m) * m


def _qnet_kernel(x_ref, w1_ref, b1_ref, w2_ref, b2_ref, w3_ref, b3_ref, o_ref):
    """Fused forward for one batch block: o = relu(relu(x@W1+b1)@W2+b2)@W3+b3.

    Matmuls in bf16 (MXU-native) with f32 accumulation; bias/ReLU in f32 (VPU).
    """
    x = x_ref[...].astype(jnp.bfloat16)                                # (TB, S)
    h1 = jnp.dot(x, w1_ref[...], preferred_element_type=jnp.float32) + b1_ref[...]
    h1 = jnp.maximum(h1, 0.0)                                          # ReLU, f32
    h2 = jnp.dot(h1.astype(jnp.bfloat16), w2_ref[...],
                 preferred_element_type=jnp.float32) + b2_ref[...]
    h2 = jnp.maximum(h2, 0.0)
    o = jnp.dot(h2.astype(jnp.bfloat16), w3_ref[...],
                preferred_element_type=jnp.float32) + b3_ref[...]
    o_ref[...] = o.astype(o_ref.dtype)                                 # (TB, A) narrow store


def qnetwork_forward(state, params, *, block_batch=1024):
    """Run the fused QNetwork forward pass via pallas_call.

    state : (B, state_size) float32
    params: dict with w1 (S,H1) bf16, b1 (1,H1) f32, w2 (H1,H2) bf16,
            b2 (1,H2) f32, w3 (H2,A) bf16, b3 (1,A) f32.
    Returns (B, A) in state.dtype.
    """
    w1, b1 = params["w1"], params["b1"]
    w2, b2 = params["w2"], params["b2"]
    w3, b3 = params["w3"], params["b3"]

    B, S = state.shape
    H1 = w1.shape[1]
    H2 = w2.shape[1]
    A = w3.shape[1]

    # Batch tile: multiple of 8 (sublane), large enough to amortize the
    # ~0.35 us per-grid-step pipeline overhead against the ~50 MFLOP of MXU work.
    TB = min(_round_up(block_batch, 8), _round_up(B, 8))
    # v7x has 2 TensorCores: ensure >=2 batch blocks whenever the batch can be
    # split, so the "parallel" axis actually shards (no-op on 1-TC v5e/v6e).
    if B >= 16 and pl.cdiv(B, TB) < 2:
        TB = _round_up(pl.cdiv(B, 2), 8)

    # Ragged last block is fine: out-of-bounds reads are garbage rows whose
    # masked output writes are discarded — no wrapper-side pad or slice needed.
    grid = (pl.cdiv(B, TB),)

    resident = pl.BlockSpec(memory_space=pltpu.MemorySpace.VMEM)  # whole array, VMEM-resident

    flops = 2 * B * (S * H1 + H1 * H2 + H2 * A)
    bytes_accessed = (B * (S + A) * 4                      # activations in/out (f32)
                      + (S * H1 + H1 * H2 + H2 * A) * 2    # bf16 weights
                      + (H1 + H2 + A) * 4)                 # f32 biases

    out = pl.pallas_call(
        _qnet_kernel,
        out_shape=jax.ShapeDtypeStruct((B, A), state.dtype),
        grid=grid,
        in_specs=[
            pl.BlockSpec((TB, S), lambda i: (i, 0)),   # activations: blocked on batch
            resident, resident,                         # w1, b1
            resident, resident,                         # w2, b2
            resident, resident,                         # w3, b3
        ],
        out_specs=pl.BlockSpec((TB, A), lambda i: (i, 0)),
        compiler_params=pltpu.CompilerParams(
            dimension_semantics=("parallel",),          # shard batch blocks across TCs (v7x)
        ),
        cost_estimate=pl.CostEstimate(
            flops=flops, transcendentals=0, bytes_accessed=bytes_accessed),
    )(state, w1, b1, w2, b2, w3, b3)

    return out


def init_params(key, state_size, action_size, h1_size=256, h2_size=256):
    """Init mirroring nn.Linear's uniform(-1/sqrt(fan_in), 1/sqrt(fan_in)).

    Weights stored as bf16 (MXU-native), biases as f32. No output padding —
    the kernel writes the true (B, action_size) result.
    """
    ks = jax.random.split(key, 6)

    def linear(kw, kb, fan_in, fan_out):
        bound = 1.0 / jnp.sqrt(jnp.float32(fan_in))
        w = jax.random.uniform(kw, (fan_in, fan_out), jnp.float32, -bound, bound)
        b = jax.random.uniform(kb, (1, fan_out), jnp.float32, -bound, bound)
        return w, b

    w1, b1 = linear(ks[0], ks[1], state_size, h1_size)
    w2, b2 = linear(ks[2], ks[3], h1_size, h2_size)
    w3, b3 = linear(ks[4], ks[5], h2_size, action_size)

    return {
        "w1": w1.astype(jnp.bfloat16), "b1": b1,
        "w2": w2.astype(jnp.bfloat16), "b2": b2,
        "w3": w3.astype(jnp.bfloat16), "b3": b3,
    }


def _reference_forward(state, p):
    """Pure-JAX reference with the same bf16-matmul / f32-accumulate numerics."""
    bf = jnp.bfloat16
    f32 = jnp.float32
    h1 = jnp.maximum(
        jnp.dot(state.astype(bf), p["w1"], preferred_element_type=f32) + p["b1"], 0.0)
    h2 = jnp.maximum(
        jnp.dot(h1.astype(bf), p["w2"], preferred_element_type=f32) + p["b2"], 0.0)
    o = jnp.dot(h2.astype(bf), p["w3"], preferred_element_type=f32) + p["b3"]
    return o.astype(state.dtype)


if __name__ == "__main__":
    key = jax.random.PRNGKey(0)
    k_params, k_state = jax.random.split(key)

    state_size, action_size = 8, 4
    batch = 8

    params = init_params(k_params, state_size, action_size, h1_size=256, h2_size=256)
    state = jax.random.normal(k_state, (batch, state_size), jnp.float32)

    out = qnetwork_forward(state, params)
    out = jax.block_until_ready(out)

    ref = _reference_forward(state, params)
    assert out.shape == (batch, action_size), out.shape
    assert jnp.allclose(out, ref, atol=2e-2, rtol=2e-2), "mismatch vs pure-JAX reference"

    print("KERNEL_OK")
</pallas_src>

<mosaic_0001>
module attributes {stable_mosaic.version = 11 : i64} {
  func.func @_qnet_kernel(%arg0: i32, %arg1: memref<8x8xf32, #tpu.memory_space<vmem>>, %arg2: memref<8x256xbf16, #tpu.memory_space<vmem>>, %arg3: memref<1x256xf32, #tpu.memory_space<vmem>>, %arg4: memref<256x256xbf16, #tpu.memory_space<vmem>>, %arg5: memref<1x256xf32, #tpu.memory_space<vmem>>, %arg6: memref<256x4xbf16, #tpu.memory_space<vmem>>, %arg7: memref<1x4xf32, #tpu.memory_space<vmem>>, %arg8: memref<8x4xf32, #tpu.memory_space<vmem>>) attributes {dimension_semantics = [#tpu.dimension_semantics<parallel>], iteration_bounds = array<i64: 1>, scalar_prefetch = 0 : i64, scratch_operands = 0 : i64, tpu.core_type = #tpu.core_type<tc>, window_params = [{transform_indices = @transform_0, window_bounds = array<i64: 8, 8>}, {pipeline_mode = #tpu.pipeline_mode<synchronous>, transform_indices = @transform_1, window_bounds = array<i64: 8, 256>}, {pipeline_mode = #tpu.pipeline_mode<synchronous>, transform_indices = @transform_2, window_bounds = array<i64: 1, 256>}, {pipeline_mode = #tpu.pipeline_mode<synchronous>, transform_indices = @transform_3, window_bounds = array<i64: 256, 256>}, {pipeline_mode = #tpu.pipeline_mode<synchronous>, transform_indices = @transform_4, window_bounds = array<i64: 1, 256>}, {pipeline_mode = #tpu.pipeline_mode<synchronous>, transform_indices = @transform_5, window_bounds = array<i64: 256, 4>}, {pipeline_mode = #tpu.pipeline_mode<synchronous>, transform_indices = @transform_6, window_bounds = array<i64: 1, 4>}, {transform_indices = @transform_7, window_bounds = array<i64: 8, 4>}]} {
    %c0 = arith.constant 0 : index
    %c0_0 = arith.constant 0 : index
    %0 = vector.load %arg1[%c0, %c0_0] : memref<8x8xf32, #tpu.memory_space<vmem>>, vector<8x8xf32>
    %1 = arith.truncf %0 : vector<8x8xf32> to vector<8x8xbf16>
    %c0_1 = arith.constant 0 : index
    %c0_2 = arith.constant 0 : index
    %2 = vector.load %arg2[%c0_1, %c0_2] : memref<8x256xbf16, #tpu.memory_space<vmem>>, vector<8x256xbf16>
    %cst = arith.constant dense<0.000000e+00> : vector<8x256xf32>
    %3 = tpu.matmul %1, %2, %cst {dimension_numbers = #tpu.dot_dimension_numbers<[1], [0], [0], [1], [0, 0, 1, 1], [], []>} : vector<8x8xbf16>, vector<8x256xbf16>, vector<8x256xf32> -> vector<8x256xf32>
    %c0_3 = arith.constant 0 : index
    %c0_4 = arith.constant 0 : index
    %4 = vector.load %arg3[%c0_3, %c0_4] : memref<1x256xf32, #tpu.memory_space<vmem>>, vector<1x256xf32>
    %5 = vector.broadcast %4 : vector<1x256xf32> to vector<8x256xf32>
    %6 = arith.addf %3, %5 : vector<8x256xf32>
    %cst_5 = arith.constant 0.000000e+00 : f32
    %7 = vector.broadcast %cst_5 : f32 to vector<8x256xf32>
    %8 = arith.maximumf %6, %7 : vector<8x256xf32>
    %9 = arith.truncf %8 : vector<8x256xf32> to vector<8x256xbf16>
    %c0_6 = arith.constant 0 : index
    %c0_7 = arith.constant 0 : index
    %10 = vector.load %arg4[%c0_6, %c0_7] : memref<256x256xbf16, #tpu.memory_space<vmem>>, vector<256x256xbf16>
    %cst_8 = arith.constant dense<0.000000e+00> : vector<8x256xf32>
    %11 = tpu.matmul %9, %10, %cst_8 {dimension_numbers = #tpu.dot_dimension_numbers<[1], [0], [0], [1], [0, 0, 1, 1], [], []>} : vector<8x256xbf16>, vector<256x256xbf16>, vector<8x256xf32> -> vector<8x256xf32>
    %c0_9 = arith.constant 0 : index
    %c0_10 = arith.constant 0 : index
    %12 = vector.load %arg5[%c0_9, %c0_10] : memref<1x256xf32, #tpu.memory_space<vmem>>, vector<1x256xf32>
    %13 = vector.broadcast %12 : vector<1x256xf32> to vector<8x256xf32>
    %14 = arith.addf %11, %13 : vector<8x256xf32>
    %cst_11 = arith.constant 0.000000e+00 : f32
    %15 = vector.broadcast %cst_11 : f32 to vector<8x256xf32>
    %16 = arith.maximumf %14, %15 : vector<8x256xf32>
    %17 = arith.truncf %16 : vector<8x256xf32> to vector<8x256xbf16>
    %c0_12 = arith.constant 0 : index
    %c0_13 = arith.constant 0 : index
    %18 = vector.load %arg6[%c0_12, %c0_13] : memref<256x4xbf16, #tpu.memory_space<vmem>>, vector<256x4xbf16>
    %cst_14 = arith.constant dense<0.000000e+00> : vector<8x4xf32>
    %19 = tpu.matmul %17, %18, %cst_14 {dimension_numbers = #tpu.dot_dimension_numbers<[1], [0], [0], [1], [0, 0, 1, 1], [], []>} : vector<8x256xbf16>, vector<256x4xbf16>, vector<8x4xf32> -> vector<8x4xf32>
    %c0_15 = arith.constant 0 : index
    %c0_16 = arith.constant 0 : index
    %20 = vector.load %arg7[%c0_15, %c0_16] : memref<1x4xf32, #tpu.memory_space<vmem>>, vector<1x4xf32>
    %21 = vector.broadcast %20 : vector<1x4xf32> to vector<8x4xf32>
    %22 = arith.addf %19, %21 : vector<8x4xf32>
    %c0_17 = arith.constant 0 : index
    %c0_18 = arith.constant 0 : index
    %23 = vector.load %arg8[%c0_17, %c0_18] : memref<8x4xf32, #tpu.memory_space<vmem>>, vector<8x4xf32>
    tpu.vector_store %arg8[%c0_17, %c0_18], %22 {strides = array<i32>} : memref<8x4xf32, #tpu.memory_space<vmem>>, vector<8x4xf32>,
    return
  }
  func.func @transform_0(%arg0: i32) -> (i32, i32) {
    %c0_i32 = arith.constant 0 : i32
    %c0_i32_0 = arith.constant 0 : i32
    return %arg0, %c0_i32 : i32, i32
  }
  func.func @transform_1(%arg0: i32) -> (i32, i32) {
    %c0_i32 = arith.constant 0 : i32
    %c0_i32_0 = arith.constant 0 : i32
    %c0_i32_1 = arith.constant 0 : i32
    return %c0_i32, %c0_i32_0 : i32, i32
  }
  func.func @transform_2(%arg0: i32) -> (i32, i32) {
    %c0_i32 = arith.constant 0 : i32
    %c0_i32_0 = arith.constant 0 : i32
    %c0_i32_1 = arith.constant 0 : i32
    return %c0_i32, %c0_i32_0 : i32, i32
  }
  func.func @transform_3(%arg0: i32) -> (i32, i32) {
    %c0_i32 = arith.constant 0 : i32
    %c0_i32_0 = arith.constant 0 : i32
    %c0_i32_1 = arith.constant 0 : i32
    return %c0_i32, %c0_i32_0 : i32, i32
  }
  func.func @transform_4(%arg0: i32) -> (i32, i32) {
    %c0_i32 = arith.constant 0 : i32
    %c0_i32_0 = arith.constant 0 : i32
    %c0_i32_1 = arith.constant 0 : i32
    return %c0_i32, %c0_i32_0 : i32, i32
  }
  func.func @transform_5(%arg0: i32) -> (i32, i32) {
    %c0_i32 = arith.constant 0 : i32
    %c0_i32_0 = arith.constant 0 : i32
    %c0_i32_1 = arith.constant 0 : i32
    return %c0_i32, %c0_i32_0 : i32, i32
  }
  func.func @transform_6(%arg0: i32) -> (i32, i32) {
    %c0_i32 = arith.constant 0 : i32
    %c0_i32_0 = arith.constant 0 : i32
    %c0_i32_1 = arith.constant 0 : i32
    return %c0_i32, %c0_i32_0 : i32, i32
  }
  func.func @transform_7(%arg0: i32) -> (i32, i32) {
    %c0_i32 = arith.constant 0 : i32
    %c0_i32_0 = arith.constant 0 : i32
    return %arg0, %c0_i32 : i32, i32
  }
}

</mosaic_0001>

<llo_original>
// kernel: tpu_custom_call.1
$region0: #{tpu_custom_call.1}
  #allocation0 [shape = 'u32[]', space=smem, size = 0x4, offset = 0x4, fixed_abs, tag = 'smem constant byte address 0x4 - core index']
  #allocation1 [shape = 'u32[72,128]{1,0:T(1,128)}', space=vmem, size = 0x9000, scoped, tag = 'internal scratch']
  %s0 = inlined_call_operand.vmem [shape: f32[8,8], index: 0, kind: input, shape index: {}]
  %s1 = inlined_call_operand.vmem [shape: bf16[8,256], index: 1, kind: input, shape index: {}]
  %s2 = inlined_call_operand.vmem [shape: f32[1,256], index: 2, kind: input, shape index: {}]
  %s3 = inlined_call_operand.hbm [shape: bf16[256,256], index: 3, kind: input, shape index: {}]
  %s4 = inlined_call_operand.vmem [shape: f32[1,256], index: 4, kind: input, shape index: {}]
  %s5 = inlined_call_operand.vmem [shape: bf16[256,4], index: 5, kind: input, shape index: {}]
  %s6 = inlined_call_operand.vmem [shape: f32[1,4], index: 6, kind: input, shape index: {}]
  %s7 = inlined_call_operand.vmem [shape: f32[8,4], index: 7, kind: output, shape index: {}]
  %s8 = sld [smem:[#allocation0]]
  $region42: #{tpu_custom_call.1} parent=0
    _
  %s10 = ssub.s32 1, %s8
  %s11 = scalar_select 0, %s10, %s8
  $region1: #{tpu_custom_call.1} parent=0
    #allocation2 [shape = 'u8[131072]{0}', space=vmem, size = 0x20000, scoped, tag = 'input window, operand 3, single buffered']
    #allocation3 [shape = 's32[1]{0}', space=sflag, size = 0x4, scoped, tag = 'scoped memory for tpu_custom_call.1']
    %12 = vsyncpa [#allocation3], 0
    // Predicated region
    $region2: #{tpu_custom_call.1} parent=1 // pred_check
      _
    $region3: #{tpu_custom_call.1} parent=1 // pred_check_branch
      %14 = sbr.rel (0) target = $region5
    $region4: #{tpu_custom_call.1} parent=1 // pred_region
      _
    $region5: #{tpu_custom_call.1} parent=1 // pred_fallthru
      _
    // Predicated region
    $region6: #{tpu_custom_call.1} parent=1 // pred_check
      _
    $region7: #{tpu_custom_call.1} parent=1 // pred_check_branch
      %16 = sbr.rel (0) target = $region9
    $region8: #{tpu_custom_call.1} parent=1 // pred_region
      _
    $region9: #{tpu_custom_call.1} parent=1 // pred_fallthru
      _
    // Predicated region
    $region10: #{tpu_custom_call.1} parent=1 // pred_check
      _
    $region11: #{tpu_custom_call.1} parent=1 // pred_check_branch
      %18 = sbr.rel (0) target = $region13
    $region12: #{tpu_custom_call.1} parent=1 // pred_region
      _
    $region13: #{tpu_custom_call.1} parent=1 // pred_fallthru
      _
    // Predicated region
    $region14: #{tpu_custom_call.1} parent=1 // pred_check
      _
    $region15: #{tpu_custom_call.1} parent=1 // pred_check_branch
      %20 = sbr.rel (0) target = $region17
    $region16: #{tpu_custom_call.1} parent=1 // pred_region
      %22 = vsyncadd [#allocation3], 0
      %s23 = sshll.u32 %s3, 4
      %s24 = int_to_ptr.hbm [resolvable:$true] %s23
      %s25 = sshll.u32 [#allocation2], 4
      %s26 = int_to_ptr.vmem [resolvable:$true] %s25
      %31 = dma.hbm_to_vmem [thread:$0]  %s24, 4096, %s26, [#allocation3], 128, 128, 8
    $region17: #{tpu_custom_call.1} parent=1 // pred_fallthru
      _
    // Predicated region
    $region18: #{tpu_custom_call.1} parent=1 // pred_check
      _
    $region19: #{tpu_custom_call.1} parent=1 // pred_check_branch
      %33 = sbr.rel (0) target = $region21
    $region20: #{tpu_custom_call.1} parent=1 // pred_region
      _
    $region21: #{tpu_custom_call.1} parent=1 // pred_fallthru
      _
    // Predicated region
    $region22: #{tpu_custom_call.1} parent=1 // pred_check
      _
    $region23: #{tpu_custom_call.1} parent=1 // pred_check_branch
      %35 = sbr.rel (0) target = $region25
    $region24: #{tpu_custom_call.1} parent=1 // pred_region
      _
    $region25: #{tpu_custom_call.1} parent=1 // pred_fallthru
      _
    // Predicated region
    $region26: #{tpu_custom_call.1} parent=1 // pred_check
      _
    $region27: #{tpu_custom_call.1} parent=1 // pred_check_branch
      %37 = sbr.rel (0) target = $region29
    $region28: #{tpu_custom_call.1} parent=1 // pred_region
      _
    $region29: #{tpu_custom_call.1} parent=1 // pred_fallthru
      _
    // Predicated region
    $region30: #{tpu_custom_call.1} parent=1 // pred_check
      _
    $region31: #{tpu_custom_call.1} parent=1 // pred_check_branch
      %39 = sbr.rel (0) target = $region33
    $region32: #{tpu_custom_call.1} parent=1 // pred_region
      %41 = dma.done [#allocation3], 4096
    $region33: #{tpu_custom_call.1} parent=1 // pred_fallthru
      _
    %v43 = vld [vmem:[%s0] sm:$0xff]
    %v44 = vpack.c.bf16 %v43, %v43
    %v45 = vld [vmem:[%s1] sm:$0xff]
    %v46 = vld [vmem:[%s2] sm:$0x3]
    %v48 = vperm.slane %v46, 0
    %v49 = vperm.slane %v46, 1
    %v53 = vunpack.c.l.b16 %v45
    %v54 = vunpack.c.h.b16 %v45
    %v55 = vpack.c.b16 %v53, %v53
    %v56 = vpack.c.b16 %v54, %v54
    %vm57 = vcmask 64512
    %v59 = vsel %vm57, %v44, 0
    %vm61 = vcmask 1043456
    %v63 = vsel %vm61, %v55, 0
    %v66 = vsel %vm61, %v56, 0
    %68 = vmatpush.bf16.msra.mxu0 0
    %69 = vmatpush.bf16.msra.mxu0 0
    %70 = vmatpush.bf16.msra.mxu0 0
    %71 = vmatpush.bf16.msra.mxu0 0
    %72 = vmatpush.bf16.msra.mxu0 0
    %73 = vmatpush.bf16.msra.mxu0 0
    %74 = vmatpush.bf16.msra.mxu0 0
    %75 = vmatpush.bf16.msra.mxu0 %v63
    %76 = vmatmul.bf16.gmra.mxu0 %v59
    %v77 = vpop.f32.mrf.mxu0
    %v78 = vadd.f32 %v48, %v77
    %v79 = vpop.f32.mrf.mxu0
    %80 = vdwg.mxu0
    %81 = vmatpush.bf16.msra.mxu0 0
    %82 = vmatpush.bf16.msra.mxu0 0
    %83 = vmatpush.bf16.msra.mxu0 0
    %84 = vmatpush.bf16.msra.mxu0 0
    %85 = vmatpush.bf16.msra.mxu0 0
    %86 = vmatpush.bf16.msra.mxu0 0
    %87 = vmatpush.bf16.msra.mxu0 0
    %88 = vmatpush.bf16.msra.mxu0 %v66
    %89 = vmatmul.bf16.gmra.mxu0 %v59
    %v90 = vpop.f32.mrf.mxu0
    %v91 = vadd.f32 %v49, %v90
    %v92 = vpop.f32.mrf.mxu0
    %93 = vdwg.mxu0
    %v94 = vmax.f32 %v78, 0.0
    %v95 = vmax.f32 %v91, 0.0
    %v96 = vpack.c.bf16 %v94, %v94
    %v97 = vpack.c.bf16 %v95, %v95
    %v98 = vld [vmem:[#allocation2] sm:$0xff]
    %v99 = vld [vmem:[#allocation2 + $0x8] sm:$0xff]
    %v100 = vld [vmem:[#allocation2 + $0x10] sm:$0xff]
    %v101 = vld [vmem:[#allocation2 + $0x18] sm:$0xff]
    %v102 = vld [vmem:[#allocation2 + $0x20] sm:$0xff]
    %v103 = vld [vmem:[#allocation2 + $0x28] sm:$0xff]
    %v104 = vld [vmem:[#allocation2 + $0x30] sm:$0xff]
    %v105 = vld [vmem:[#allocation2 + $0x38] sm:$0xff]
    %v106 = vld [vmem:[#allocation2 + $0x40] sm:$0xff]
    %v107 = vld [vmem:[#allocation2 + $0x48] sm:$0xff]
    %v108 = vld [vmem:[#allocation2 + $0x50] sm:$0xff]
    %v109 = vld [vmem:[#allocation2 + $0x58] sm:$0xff]
    %v110 = vld [vmem:[#allocation2 + $0x60] sm:$0xff]
    %v111 = vld [vmem:[#allocation2 + $0x68] sm:$0xff]
    %v112 = vld [vmem:[#allocation2 + $0x70] sm:$0xff]
    %v113 = vld [vmem:[#allocation2 + $0x78] sm:$0xff]
    %v114 = vld [vmem:[#allocation2 + $0x80] sm:$0xff]
    %v115 = vld [vmem:[#allocation2 + $0x88] sm:$0xff]
    %v116 = vld [vmem:[#allocation2 + $0x90] sm:$0xff]
    %v117 = vld [vmem:[#allocation2 + $0x98] sm:$0xff]
    %v118 = vld [vmem:[#allocation2 + $0xa0] sm:$0xff]
    %v119 = vld [vmem:[#allocation2 + $0xa8] sm:$0xff]
    %v120 = vld [vmem:[#allocation2 + $0xb0] sm:$0xff]
    %v121 = vld [vmem:[#allocation2 + $0xb8] sm:$0xff]
    %v122 = vld [vmem:[#allocation2 + $0xc0] sm:$0xff]
    %v123 = vld [vmem:[#allocation2 + $0xc8] sm:$0xff]
    %v124 = vld [vmem:[#allocation2 + $0xd0] sm:$0xff]
    %v125 = vld [vmem:[#allocation2 + $0xd8] sm:$0xff]
    %v126 = vld [vmem:[#allocation2 + $0xe0] sm:$0xff]
    %v127 = vld [vmem:[#allocation2 + $0xe8] sm:$0xff]
    %v128 = vld [vmem:[#allocation2 + $0xf0] sm:$0xff]
    %v129 = vld [vmem:[#allocation2 + $0xf8] sm:$0xff]
    %v130 = vld [vmem:[%s4] sm:$0x3]
    %v132 = vperm.slane %v130, 0
    %v133 = vperm.slane %v130, 1
    %v168 = vunpack.c.l.b16 %v98
    %v169 = vunpack.c.h.b16 %v98
    %v170 = vunpack.c.l.b16 %v99
    %v171 = vunpack.c.h.b16 %v99
    %v172 = vunpack.c.l.b16 %v100
    %v173 = vunpack.c.h.b16 %v100
    %v174 = vunpack.c.l.b16 %v101
    %v175 = vunpack.c.h.b16 %v101
    %v176 = vunpack.c.l.b16 %v102
    %v177 = vunpack.c.h.b16 %v102
    %v178 = vunpack.c.l.b16 %v103
    %v179 = vunpack.c.h.b16 %v103
    %v180 = vunpack.c.l.b16 %v104
    %v181 = vunpack.c.h.b16 %v104
    %v182 = vunpack.c.l.b16 %v105
    %v183 = vunpack.c.h.b16 %v105
    %v184 = vunpack.c.l.b16 %v106
    %v185 = vunpack.c.h.b16 %v106
    %v186 = vunpack.c.l.b16 %v107
    %v187 = vunpack.c.h.b16 %v107
    %v188 = vunpack.c.l.b16 %v108
    %v189 = vunpack.c.h.b16 %v108
    %v190 = vunpack.c.l.b16 %v109
    %v191 = vunpack.c.h.b16 %v109
    %v192 = vunpack.c.l.b16 %v110
    %v193 = vunpack.c.h.b16 %v110
    %v194 = vunpack.c.l.b16 %v111
    %v195 = vunpack.c.h.b16 %v111
    %v196 = vunpack.c.l.b16 %v112
    %v197 = vunpack.c.h.b16 %v112
    %v198 = vunpack.c.l.b16 %v113
    %v199 = vunpack.c.h.b16 %v113
    %v200 = vunpack.c.l.b16 %v114
    %v201 = vunpack.c.h.b16 %v114
    %v202 = vunpack.c.l.b16 %v115
    %v203 = vunpack.c.h.b16 %v115
    %v204 = vunpack.c.l.b16 %v116
    %v205 = vunpack.c.h.b16 %v116
    %v206 = vunpack.c.l.b16 %v117
    %v207 = vunpack.c.h.b16 %v117
    %v208 = vunpack.c.l.b16 %v118
    %v209 = vunpack.c.h.b16 %v118
    %v210 = vunpack.c.l.b16 %v119
    %v211 = vunpack.c.h.b16 %v119
    %v212 = vunpack.c.l.b16 %v120
    %v213 = vunpack.c.h.b16 %v120
    %v214 = vunpack.c.l.b16 %v121
    %v215 = vunpack.c.h.b16 %v121
    %v216 = vunpack.c.l.b16 %v122
    %v217 = vunpack.c.h.b16 %v122
    %v218 = vunpack.c.l.b16 %v123
    %v219 = vunpack.c.h.b16 %v123
    %v220 = vunpack.c.l.b16 %v124
    %v221 = vunpack.c.h.b16 %v124
    %v222 = vunpack.c.l.b16 %v125
    %v223 = vunpack.c.h.b16 %v125
    %v224 = vunpack.c.l.b16 %v126
    %v225 = vunpack.c.h.b16 %v126
    %v226 = vunpack.c.l.b16 %v127
    %v227 = vunpack.c.h.b16 %v127
    %v228 = vunpack.c.l.b16 %v128
    %v229 = vunpack.c.h.b16 %v128
    %v230 = vunpack.c.l.b16 %v129
    %v231 = vunpack.c.h.b16 %v129
    %v232 = vpack.c.b16 %v170, %v168
    %v233 = vpack.c.b16 %v171, %v169
    %v234 = vpack.c.b16 %v174, %v172
    %v235 = vpack.c.b16 %v175, %v173
    %v236 = vpack.c.b16 %v178, %v176
    %v237 = vpack.c.b16 %v179, %v177
    %v238 = vpack.c.b16 %v182, %v180
    %v239 = vpack.c.b16 %v183, %v181
    %v240 = vpack.c.b16 %v186, %v184
    %v241 = vpack.c.b16 %v187, %v185
    %v242 = vpack.c.b16 %v190, %v188
    %v243 = vpack.c.b16 %v191, %v189
    %v244 = vpack.c.b16 %v194, %v192
    %v245 = vpack.c.b16 %v195, %v193
    %v246 = vpack.c.b16 %v198, %v196
    %v247 = vpack.c.b16 %v199, %v197
    %v248 = vpack.c.b16 %v202, %v200
    %v249 = vpack.c.b16 %v203, %v201
    %v250 = vpack.c.b16 %v206, %v204
    %v251 = vpack.c.b16 %v207, %v205
    %v252 = vpack.c.b16 %v210, %v208
    %v253 = vpack.c.b16 %v211, %v209
    %v254 = vpack.c.b16 %v214, %v212
    %v255 = vpack.c.b16 %v215, %v213
    %v256 = vpack.c.b16 %v218, %v216
    %v257 = vpack.c.b16 %v219, %v217
    %v258 = vpack.c.b16 %v222, %v220
    %v259 = vpack.c.b16 %v223, %v221
    %v260 = vpack.c.b16 %v226, %v224
    %v261 = vpack.c.b16 %v227, %v225
    %v262 = vpack.c.b16 %v230, %v228
    %v263 = vpack.c.b16 %v231, %v229
    %296 = vmatpush.bf16.msra.mxu0 %v246
    %297 = vmatpush.bf16.msra.mxu0 %v244
    %298 = vmatpush.bf16.msra.mxu0 %v242
    %299 = vmatpush.bf16.msra.mxu0 %v240
    %300 = vmatpush.bf16.msra.mxu0 %v238
    %301 = vmatpush.bf16.msra.mxu0 %v236
    %302 = vmatpush.bf16.msra.mxu0 %v234
    %303 = vmatpush.bf16.msra.mxu0 %v232
    %304 = vmatmul.bf16.gmra.mxu0 %v96
    %v305 = vpop.f32.mrf.mxu0
    %v306 = vadd.f32 %v132, %v305
    %v307 = vpop.f32.mrf.mxu0
    %308 = vdwg.mxu0
    %309 = vmatpush.bf16.msra.mxu0 %v262
    %310 = vmatpush.bf16.msra.mxu0 %v260
    %311 = vmatpush.bf16.msra.mxu0 %v258
    %312 = vmatpush.bf16.msra.mxu0 %v256
    %313 = vmatpush.bf16.msra.mxu0 %v254
    %314 = vmatpush.bf16.msra.mxu0 %v252
    %315 = vmatpush.bf16.msra.mxu0 %v250
    %316 = vmatpush.bf16.msra.mxu0 %v248
    %317 = vmatmul.bf16.gmra.mxu0 %v97
    %v318 = vpop.f32.mrf.mxu0
    %v319 = vadd.f32 %v306, %v318
    %v320 = vpop.f32.mrf.mxu0
    %321 = vdwg.mxu0
    %322 = vmatpush.bf16.msra.mxu0 %v247
    %323 = vmatpush.bf16.msra.mxu0 %v245
    %324 = vmatpush.bf16.msra.mxu0 %v243
    %325 = vmatpush.bf16.msra.mxu0 %v241
    %326 = vmatpush.bf16.msra.mxu0 %v239
    %327 = vmatpush.bf16.msra.mxu0 %v237
    %328 = vmatpush.bf16.msra.mxu0 %v235
    %329 = vmatpush.bf16.msra.mxu0 %v233
    %330 = vmatmul.bf16.gmra.mxu0 %v96
    %v331 = vpop.f32.mrf.mxu0
    %v332 = vadd.f32 %v133, %v331
    %v333 = vpop.f32.mrf.mxu0
    %334 = vdwg.mxu0
    %335 = vmatpush.bf16.msra.mxu0 %v263
    %336 = vmatpush.bf16.msra.mxu0 %v261
    %337 = vmatpush.bf16.msra.mxu0 %v259
    %338 = vmatpush.bf16.msra.mxu0 %v257
    %339 = vmatpush.bf16.msra.mxu0 %v255
    %340 = vmatpush.bf16.msra.mxu0 %v253
    %341 = vmatpush.bf16.msra.mxu0 %v251
    %342 = vmatpush.bf16.msra.mxu0 %v249
    %343 = vmatmul.bf16.gmra.mxu0 %v97
    %v344 = vpop.f32.mrf.mxu0
    %v345 = vadd.f32 %v332, %v344
    %v346 = vpop.f32.mrf.mxu0
    %347 = vdwg.mxu0
    %v348 = vmax.f32 %v319, 0.0
    %v349 = vmax.f32 %v345, 0.0
    %v350 = vpack.c.bf16 %v348, %v348
    %v351 = vpack.c.bf16 %v349, %v349
    %v352 = vld [vmem:[%s5] sm:$0xf]
    %v353 = vld [vmem:[%s5 + $0x4] sm:$0xf]
    %v354 = vld [vmem:[%s5 + $0x8] sm:$0xf]
    %v355 = vld [vmem:[%s5 + $0xc] sm:$0xf]
    %v356 = vld [vmem:[%s5 + $0x10] sm:$0xf]
    %v357 = vld [vmem:[%s5 + $0x14] sm:$0xf]
    %v358 = vld [vmem:[%s5 + $0x18] sm:$0xf]
    %v359 = vld [vmem:[%s5 + $0x1c] sm:$0xf]
    %v360 = vld [vmem:[%s5 + $0x20] sm:$0xf]
    %v361 = vld [vmem:[%s5 + $0x24] sm:$0xf]
    %v362 = vld [vmem:[%s5 + $0x28] sm:$0xf]
    %v363 = vld [vmem:[%s5 + $0x2c] sm:$0xf]
    %v364 = vld [vmem:[%s5 + $0x30] sm:$0xf]
    %v365 = vld [vmem:[%s5 + $0x34] sm:$0xf]
    %v366 = vld [vmem:[%s5 + $0x38] sm:$0xf]
    %v367 = vld [vmem:[%s5 + $0x3c] sm:$0xf]
    %v368 = vld [vmem:[%s5 + $0x40] sm:$0xf]
    %v369 = vld [vmem:[%s5 + $0x44] sm:$0xf]
    %v370 = vld [vmem:[%s5 + $0x48] sm:$0xf]
    %v371 = vld [vmem:[%s5 + $0x4c] sm:$0xf]
    %v372 = vld [vmem:[%s5 + $0x50] sm:$0xf]
    %v373 = vld [vmem:[%s5 + $0x54] sm:$0xf]
    %v374 = vld [vmem:[%s5 + $0x58] sm:$0xf]
    %v375 = vld [vmem:[%s5 + $0x5c] sm:$0xf]
    %v376 = vld [vmem:[%s5 + $0x60] sm:$0xf]
    %v377 = vld [vmem:[%s5 + $0x64] sm:$0xf]
    %v378 = vld [vmem:[%s5 + $0x68] sm:$0xf]
    %v379 = vld [vmem:[%s5 + $0x6c] sm:$0xf]
    %v380 = vld [vmem:[%s5 + $0x70] sm:$0xf]
    %v381 = vld [vmem:[%s5 + $0x74] sm:$0xf]
    %v382 = vld [vmem:[%s5 + $0x78] sm:$0xf]
    %v383 = vld [vmem:[%s5 + $0x7c] sm:$0xf]
    %v384 = vld [vmem:[%s6] sm:$0x1]
    %v386 = vperm.slane %v384, 0
    %v420 = vunpack.c.l.b16 %v352
    %v421 = vunpack.c.l.b16 %v353
    %v422 = vunpack.c.l.b16 %v354
    %v423 = vunpack.c.l.b16 %v355
    %v424 = vunpack.c.l.b16 %v356
    %v425 = vunpack.c.l.b16 %v357
    %v426 = vunpack.c.l.b16 %v358
    %v427 = vunpack.c.l.b16 %v359
    %v428 = vunpack.c.l.b16 %v360
    %v429 = vunpack.c.l.b16 %v361
    %v430 = vunpack.c.l.b16 %v362
    %v431 = vunpack.c.l.b16 %v363
    %v432 = vunpack.c.l.b16 %v364
    %v433 = vunpack.c.l.b16 %v365
    %v434 = vunpack.c.l.b16 %v366
    %v435 = vunpack.c.l.b16 %v367
    %v436 = vunpack.c.l.b16 %v368
    %v437 = vunpack.c.l.b16 %v369
    %v438 = vunpack.c.l.b16 %v370
    %v439 = vunpack.c.l.b16 %v371
    %v440 = vunpack.c.l.b16 %v372
    %v441 = vunpack.c.l.b16 %v373
    %v442 = vunpack.c.l.b16 %v374
    %v443 = vunpack.c.l.b16 %v375
    %v444 = vunpack.c.l.b16 %v376
    %v445 = vunpack.c.l.b16 %v377
    %v446 = vunpack.c.l.b16 %v378
    %v447 = vunpack.c.l.b16 %v379
    %v448 = vunpack.c.l.b16 %v380
    %v449 = vunpack.c.l.b16 %v381
    %v450 = vunpack.c.l.b16 %v382
    %v451 = vunpack.c.l.b16 %v383
    %v452 = vpack.c.b16 %v421, %v420
    %v453 = vpack.c.b16 %v423, %v422
    %v454 = vpack.c.b16 %v425, %v424
    %v455 = vpack.c.b16 %v427, %v426
    %v456 = vpack.c.b16 %v429, %v428
    %v457 = vpack.c.b16 %v431, %v430
    %v458 = vpack.c.b16 %v433, %v432
    %v459 = vpack.c.b16 %v435, %v434
    %v460 = vpack.c.b16 %v437, %v436
    %v461 = vpack.c.b16 %v439, %v438
    %v462 = vpack.c.b16 %v441, %v440
    %v463 = vpack.c.b16 %v443, %v442
    %v464 = vpack.c.b16 %v445, %v444
    %v465 = vpack.c.b16 %v447, %v446
    %v466 = vpack.c.b16 %v449, %v448
    %v467 = vpack.c.b16 %v451, %v450
    %484 = vmatpush.bf16.msra.mxu0 %v459
    %485 = vmatpush.bf16.msra.mxu0 %v458
    %486 = vmatpush.bf16.msra.mxu0 %v457
    %487 = vmatpush.bf16.msra.mxu0 %v456
    %488 = vmatpush.bf16.msra.mxu0 %v455
    %489 = vmatpush.bf16.msra.mxu0 %v454
    %490 = vmatpush.bf16.msra.mxu0 %v453
    %491 = vmatpush.bf16.msra.mxu0 %v452
    %492 = vmatmul.bf16.gmra.mxu0 %v350
    %v493 = vpop.f32.mrf.mxu0
    %v494 = vadd.f32 %v386, %v493
    %v495 = vpop.f32.mrf.mxu0
    %496 = vdwg.mxu0
    %497 = vmatpush.bf16.msra.mxu0 %v467
    %498 = vmatpush.bf16.msra.mxu0 %v466
    %499 = vmatpush.bf16.msra.mxu0 %v465
    %500 = vmatpush.bf16.msra.mxu0 %v464
    %501 = vmatpush.bf16.msra.mxu0 %v463
    %502 = vmatpush.bf16.msra.mxu0 %v462
    %503 = vmatpush.bf16.msra.mxu0 %v461
    %504 = vmatpush.bf16.msra.mxu0 %v460
    %505 = vmatmul.bf16.gmra.mxu0 %v351
    %v506 = vpop.f32.mrf.mxu0
    %v507 = vadd.f32 %v494, %v506
    %v508 = vpop.f32.mrf.mxu0
    %509 = vdwg.mxu0
    %vm510 = vcmask 31744
    %511 = vst.msk [vmem:[%s7] sm:$0xff] %vm510, %v507
    // Predicated region
    $region34: #{tpu_custom_call.1} parent=1 // pred_check
      _
    $region35: #{tpu_custom_call.1} parent=1 // pred_check_branch
      %513 = sbr.rel (0) target = $region37
    $region36: #{tpu_custom_call.1} parent=1 // pred_region
      _
    $region37: #{tpu_custom_call.1} parent=1 // pred_fallthru
      _
    // Predicated region
    $region38: #{tpu_custom_call.1} parent=1 // pred_check
      _
    $region39: #{tpu_custom_call.1} parent=1 // pred_check_branch
      %515 = sbr.rel (0) target = $region41
    $region40: #{tpu_custom_call.1} parent=1 // pred_region
      _
    $region41: #{tpu_custom_call.1} parent=1 // pred_fallthru
      _
    %516 = vsyncpa [#allocation3], 1

</llo_original>
